<compile_context>
chip_gen: v7x
topology: tpu7x:2x2x1
jax: 0.10.0
libtpu: 0.0.40
codegen_flags: <defaults>
</compile_context>

<pallas_src>
import functools

import jax
import jax.numpy as jnp
from jax import lax
from jax.experimental import pallas as pl
from jax.experimental.pallas import tpu as pltpu

_LANE = 128
_GATE_ORDER = ("i", "f", "o", "g")  # sigmoid gates first, tanh (cell) gate last


def _round_up(x, m):
    return (x + m - 1) // m * m


def _batch_pad(batch):
    # bf16 activations pack 16 rows per (sublane-pair); keep batch 16-aligned.
    return _round_up(batch, 16) if batch <= 256 else _round_up(batch, 256)


def _vmem_limit_bytes(est_bytes):
    """Generation-aware VMEM request (v5e/v6e: 128 MiB, v7x: 64 MiB physical)."""
    try:
        cap = pltpu.get_tpu_info().vmem_capacity_bytes
    except Exception:  # pragma: no cover - conservative fallback
        cap = 128 * 2 ** 20
    return int(min(int(0.85 * cap), max(8 * 2 ** 20, 2 * int(est_bytes))))


# ----------------------------------------------------------------------------
# Parameters (mirrors the nn.Linear layout of the PyTorch module)
# ----------------------------------------------------------------------------
def init_params(key, input_length, hidden_length, dtype=jnp.float32):
    """Per-gate weights stored as (in, out); only the W_x linears carry bias."""
    D, H = input_length, hidden_length
    kx = 1.0 / (D ** 0.5)
    kh = 1.0 / (H ** 0.5)
    spec = [
        ("wx_i", (D, H), kx), ("wh_i", (H, H), kh), ("wc_i", (H, H), kh), ("b_i", (H,), kx),
        ("wx_f", (D, H), kx), ("wh_f", (H, H), kh), ("wc_f", (H, H), kh), ("b_f", (H,), kx),
        ("wx_g", (D, H), kx), ("wh_g", (H, H), kh),                       ("b_g", (H,), kx),
        ("wx_o", (D, H), kx), ("wh_o", (H, H), kh), ("wc_o", (H, H), kh), ("b_o", (H,), kx),
    ]
    keys = jax.random.split(key, len(spec))
    return {name: jax.random.uniform(k, shape, dtype, minval=-bound, maxval=bound)
            for k, (name, shape, bound) in zip(keys, spec)}


def pack_params(params, input_length, hidden_length, compute_dtype=jnp.bfloat16):
    """Pack per-gate weights into the fused, lane-padded kernel layout.

    wx : (Dp, 4*Hp)  input->gate weights, gate order [i, f, o, g]
    wh : (Hp, 4*Hp)  hidden->gate weights
    wc : (Hp, 3*Hp)  peephole weights for [i, f, o] only (cell gate has none)
    b  : (1, 4*Hp)   f32 bias

    Call this ONCE (outside the jitted per-step path) and reuse the result.
    """
    D, H = input_length, hidden_length
    Dp, Hp = _round_up(D, _LANE), _round_up(H, _LANE)

    wx = jnp.zeros((Dp, 4 * Hp), jnp.float32)
    wh = jnp.zeros((Hp, 4 * Hp), jnp.float32)
    b = jnp.zeros((1, 4 * Hp), jnp.float32)
    for gi, g in enumerate(_GATE_ORDER):
        wx = wx.at[:D, gi * Hp:gi * Hp + H].set(params[f"wx_{g}"])
        wh = wh.at[:H, gi * Hp:gi * Hp + H].set(params[f"wh_{g}"])
        b = b.at[0, gi * Hp:gi * Hp + H].set(params[f"b_{g}"])

    wc = jnp.zeros((Hp, 3 * Hp), jnp.float32)
    for gi, g in enumerate(_GATE_ORDER[:3]):  # no peephole on the cell gate
        wc = wc.at[:H, gi * Hp:gi * Hp + H].set(params[f"wc_{g}"])

    return dict(wx=wx.astype(compute_dtype), wh=wh.astype(compute_dtype),
                wc=wc.astype(compute_dtype), b=b)


# ----------------------------------------------------------------------------
# Shared cell math (used by the kernels and by the pure-JAX references)
# ----------------------------------------------------------------------------
def _cell_math(x, h, c_f32, wx, wh, wc, b, hp):
    """Fused gate math; gate order along the 4*hp axis is [i, f, o, g].

    Sigmoid is computed as 0.5*tanh(0.5*z)+0.5 (one EUP op instead of exp+div).
    """
    z = (jnp.dot(x, wx, preferred_element_type=jnp.float32)
         + jnp.dot(h, wh, preferred_element_type=jnp.float32)
         + b)                                                          # (B, 4*hp)
    zc = jnp.dot(c_f32.astype(wc.dtype), wc,
                 preferred_element_type=jnp.float32)                   # (B, 3*hp)
    ifo = 0.5 * jnp.tanh(0.5 * (z[:, :3 * hp] + zc)) + 0.5             # i, f, o gates
    g = jnp.tanh(z[:, 3 * hp:])                                        # cell gate
    i = ifo[:, 0 * hp:1 * hp]
    f = ifo[:, 1 * hp:2 * hp]
    o = ifo[:, 2 * hp:3 * hp]
    c_next = g * i + f * c_f32
    h_next = o * jnp.tanh(c_next)
    return h_next, c_next


# ----------------------------------------------------------------------------
# Single-step cell kernel (== LSTM.forward(x, (h, c)))
# ----------------------------------------------------------------------------
def _lstm_cell_kernel(x_ref, h_ref, c_ref, wx_ref, wh_ref, wc_ref, b_ref,
                      h_out_ref, c_out_ref, *, hp):
    h_next, c_next = _cell_math(x_ref[...], h_ref[...], c_ref[...],
                                wx_ref[...], wh_ref[...], wc_ref[...], b_ref[...], hp)
    h_out_ref[...] = h_next.astype(h_out_ref.dtype)   # bf16 hidden out
    c_out_ref[...] = c_next                           # f32 cell state


def lstm_cell_pallas(x, h, c, wx, wh, wc, b):
    """One cell step on pre-packed, padded operands (c stays f32)."""
    Bp, Dp = x.shape
    hp = wc.shape[0]
    cdt = x.dtype
    # TODO(synk): use tb=128 on v5e (4x128^2 MXU) to halve the gate accumulator.
    tb = Bp if Bp <= 256 else 256
    assert Bp % tb == 0
    grid = (Bp // tb,)

    wbytes = jnp.dtype(cdt).itemsize
    flops = 2 * Bp * (Dp + hp) * 4 * hp + 2 * Bp * hp * 3 * hp + 10 * Bp * hp
    transcendentals = 5 * Bp * hp
    bytes_accessed = (Bp * (Dp + hp) + (Dp + hp) * 4 * hp + hp * 3 * hp) * wbytes \
        + 4 * hp * 4 + Bp * hp * 4 + Bp * hp * (wbytes + 4)
    vmem_est = ((Dp + hp) * 4 * hp + hp * 3 * hp) * wbytes + 4 * hp * 4 \
        + 2 * tb * (Dp + hp) * wbytes + 2 * tb * hp * 4 \
        + 2 * tb * hp * (wbytes + 4) + 3 * tb * 4 * hp * 4

    return pl.pallas_call(
        functools.partial(_lstm_cell_kernel, hp=hp),
        out_shape=(jax.ShapeDtypeStruct((Bp, hp), cdt),        # h_next (bf16)
                   jax.ShapeDtypeStruct((Bp, hp), jnp.float32)),  # c_next (f32)
        grid=grid,
        in_specs=[
            pl.BlockSpec((tb, Dp), lambda i: (i, 0)),          # x
            pl.BlockSpec((tb, hp), lambda i: (i, 0)),          # h (compute dtype)
            pl.BlockSpec((tb, hp), lambda i: (i, 0)),          # c (f32, no bf16 round trip)
            pl.BlockSpec((Dp, 4 * hp), lambda i: (0, 0)),      # Wx (VMEM resident)
            pl.BlockSpec((hp, 4 * hp), lambda i: (0, 0)),      # Wh (VMEM resident)
            pl.BlockSpec((hp, 3 * hp), lambda i: (0, 0)),      # Wc (VMEM resident)
            pl.BlockSpec((1, 4 * hp), lambda i: (0, 0)),       # bias
        ],
        out_specs=(pl.BlockSpec((tb, hp), lambda i: (i, 0)),
                   pl.BlockSpec((tb, hp), lambda i: (i, 0))),
        compiler_params=pltpu.CompilerParams(
            dimension_semantics=("parallel",),
            vmem_limit_bytes=_vmem_limit_bytes(vmem_est)),
        cost_estimate=pl.CostEstimate(flops=flops, transcendentals=transcendentals,
                                      bytes_accessed=bytes_accessed),
    )(x, h, c, wx, wh, wc, b)


def lstm_cell_forward(x, h, c, packed):
    """Module-equivalent single step: (h_next, c_next) = LSTM(x, (h, c))."""
    B, D = x.shape
    H = h.shape[1]
    wx, wh, wc, b = packed["wx"], packed["wh"], packed["wc"], packed["b"]
    Dp, hp = wx.shape[0], wc.shape[0]
    cdt = wx.dtype
    Bp = _batch_pad(B)

    x_p = jnp.zeros((Bp, Dp), cdt).at[:B, :D].set(x.astype(cdt))
    h_p = jnp.zeros((Bp, hp), cdt).at[:B, :H].set(h.astype(cdt))
    c_p = jnp.zeros((Bp, hp), jnp.float32).at[:B, :H].set(c.astype(jnp.float32))

    h_next, c_next = lstm_cell_pallas(x_p, h_p, c_p, wx, wh, wc, b)
    return h_next[:B, :H], c_next[:B, :H]


# ----------------------------------------------------------------------------
# Whole-sequence kernel: batch-parallel x time-blocked grid, weights loaded
# once, hidden carried in bf16 scratch, f32 cell carried in the resident
# c_out output block (written back to HBM exactly once per batch tile).
# ----------------------------------------------------------------------------
def _lstm_seq_kernel(x_ref, h0_ref, c0_ref, wx_ref, wh_ref, wc_ref, b_ref,
                     h_seq_ref, c_out_ref, h_sc, *, hp, tt):
    ti = pl.program_id(1)

    @pl.when(ti == 0)
    def _init():                          # new batch tile: (re)load the initial state
        h_sc[...] = h0_ref[...]
        c_out_ref[...] = c0_ref[...]      # f32 cell carry lives in the resident out block

    def step(s, carry):
        c_prev = c_out_ref[...]
        h_next, c_next = _cell_math(x_ref[s], h_sc[...], c_prev,
                                    wx_ref[...], wh_ref[...], wc_ref[...], b_ref[...], hp)
        h_b = h_next.astype(h_sc.dtype)
        h_sc[...] = h_b                   # bf16 hidden carry for the next step
        c_out_ref[...] = c_next           # f32 cell carry
        h_seq_ref[s] = h_b                # per-step hidden output (bf16)
        return carry

    lax.fori_loop(0, tt, step, 0, unroll=True)


def lstm_sequence_pallas(x_seq, h0, c0, wx, wh, wc, b, *, time_block=8):
    T, Bp, Dp = x_seq.shape
    hp = wc.shape[0]
    cdt = x_seq.dtype
    assert h0.shape == (Bp, hp) and c0.shape == (Bp, hp)

    tt = 1
    for cand in (time_block, 8, 4, 2, 1):
        if cand and T % cand == 0:
            tt = cand
            break
    tb = Bp if Bp <= 256 else 256
    assert Bp % tb == 0
    grid = (Bp // tb, T // tt)            # (parallel batch tiles, recurrent time blocks)

    wbytes = jnp.dtype(cdt).itemsize
    flops = T * (2 * Bp * (Dp + hp) * 4 * hp + 2 * Bp * hp * 3 * hp + 10 * Bp * hp)
    transcendentals = T * 5 * Bp * hp
    bytes_accessed = (T * Bp * Dp + Bp * hp + (Dp + hp) * 4 * hp + hp * 3 * hp) * wbytes \
        + 4 * hp * 4 + 2 * Bp * hp * 4 + T * Bp * hp * wbytes
    vmem_est = ((Dp + hp) * 4 * hp + hp * 3 * hp) * wbytes + 4 * hp * 4 \
        + 2 * tt * tb * (Dp + hp) * wbytes \
        + 2 * tb * hp * (wbytes + 4) + 2 * tb * hp * 4 + tb * hp * wbytes \
        + 3 * tb * 4 * hp * 4

    return pl.pallas_call(
        functools.partial(_lstm_seq_kernel, hp=hp, tt=tt),
        out_shape=(jax.ShapeDtypeStruct((T, Bp, hp), cdt),        # h sequence (bf16)
                   jax.ShapeDtypeStruct((Bp, hp), jnp.float32)),  # final cell state (f32)
        grid=grid,
        in_specs=[
            pl.BlockSpec((tt, tb, Dp), lambda bi, ti: (ti, bi, 0)),  # x block, streamed
            pl.BlockSpec((tb, hp), lambda bi, ti: (bi, 0)),          # h0
            pl.BlockSpec((tb, hp), lambda bi, ti: (bi, 0)),          # c0 (f32)
            pl.BlockSpec((Dp, 4 * hp), lambda bi, ti: (0, 0)),       # Wx (resident)
            pl.BlockSpec((hp, 4 * hp), lambda bi, ti: (0, 0)),       # Wh (resident)
            pl.BlockSpec((hp, 3 * hp), lambda bi, ti: (0, 0)),       # Wc (resident)
            pl.BlockSpec((1, 4 * hp), lambda bi, ti: (0, 0)),        # bias
        ],
        out_specs=(pl.BlockSpec((tt, tb, hp), lambda bi, ti: (ti, bi, 0)),
                   pl.BlockSpec((tb, hp), lambda bi, ti: (bi, 0))),  # resident over time
        scratch_shapes=[pltpu.VMEM((tb, hp), cdt)],                  # bf16 hidden carry
        compiler_params=pltpu.CompilerParams(
            dimension_semantics=("parallel", "arbitrary"),
            vmem_limit_bytes=_vmem_limit_bytes(vmem_est)),
        cost_estimate=pl.CostEstimate(flops=flops, transcendentals=transcendentals,
                                      bytes_accessed=bytes_accessed),
    )(x_seq, h0, c0, wx, wh, wc, b)


def lstm_sequence_forward(x_seq, h0, c0, packed, *, time_block=8):
    T, B, D = x_seq.shape
    H = h0.shape[1]
    wx, wh, wc, b = packed["wx"], packed["wh"], packed["wc"], packed["b"]
    Dp, hp = wx.shape[0], wc.shape[0]
    cdt = wx.dtype
    Bp = _batch_pad(B)

    x_p = jnp.zeros((T, Bp, Dp), cdt).at[:, :B, :D].set(x_seq.astype(cdt))
    h_p = jnp.zeros((Bp, hp), cdt).at[:B, :H].set(h0.astype(cdt))
    c_p = jnp.zeros((Bp, hp), jnp.float32).at[:B, :H].set(c0.astype(jnp.float32))

    h_seq, c_T = lstm_sequence_pallas(x_p, h_p, c_p, wx, wh, wc, b, time_block=time_block)
    return h_seq[:, :B, :H], c_T[:B, :H]


# ----------------------------------------------------------------------------
# Pure-JAX references
# ----------------------------------------------------------------------------
def lstm_ref(x, h, c, p):
    """f32 reference with the exact per-gate math of the PyTorch module."""
    i = jax.nn.sigmoid(x @ p["wx_i"] + h @ p["wh_i"] + c @ p["wc_i"] + p["b_i"])
    f = jax.nn.sigmoid(x @ p["wx_f"] + h @ p["wh_f"] + c @ p["wc_f"] + p["b_f"])
    k = jnp.tanh(x @ p["wx_g"] + h @ p["wh_g"] + p["b_g"])
    o = jax.nn.sigmoid(x @ p["wx_o"] + h @ p["wh_o"] + c @ p["wc_o"] + p["b_o"])
    c_next = k * i + f * c
    h_next = o * jnp.tanh(c_next)
    return h_next, c_next


def lstm_cell_ref_packed(x, h, c_f32, wx, wh, wc, b):
    """Same packed bf16 math as the kernel (tight-tolerance check)."""
    return _cell_math(x, h, c_f32, wx, wh, wc, b, wc.shape[0])


def lstm_seq_ref_packed(x_seq, h0, c0_f32, wx, wh, wc, b):
    hp = wc.shape[0]

    def step(carry, x_t):
        h_low, c_f32 = carry
        h_next, c_next = _cell_math(x_t, h_low, c_f32, wx, wh, wc, b, hp)
        h_b = h_next.astype(h_low.dtype)
        return (h_b, c_next), h_b

    (_, c_T), h_seq = lax.scan(step, (h0, c0_f32), x_seq)
    return h_seq, c_T


# ----------------------------------------------------------------------------
if __name__ == "__main__":
    input_length, hidden_length = 16, 32
    batch, seq_len = 2, 8
    compute_dtype = jnp.bfloat16

    key = jax.random.PRNGKey(0)
    k_x, k_h, k_c, k_p = jax.random.split(key, 4)
    x_seq = jax.random.normal(k_x, (seq_len, batch, input_length), jnp.float32)
    h0 = jax.random.normal(k_h, (batch, hidden_length), jnp.float32)
    c0 = jax.random.normal(k_c, (batch, hidden_length), jnp.float32)
    params = init_params(k_p, input_length, hidden_length)

    # Pack the weights ONCE, outside the jitted hot path.
    packed = pack_params(params, input_length, hidden_length, compute_dtype)

    # ---- single-step cell (module semantics) -------------------------------
    cell = jax.jit(lstm_cell_forward)
    h1, c1 = cell(x_seq[0], h0, c0, packed)
    jax.block_until_ready((h1, c1))

    # tight check against the identical packed bf16 math
    Dp, hp = packed["wx"].shape[0], packed["wc"].shape[0]
    Bp = _batch_pad(batch)
    x_p = jnp.zeros((Bp, Dp), compute_dtype).at[:batch, :input_length].set(
        x_seq[0].astype(compute_dtype))
    h_p = jnp.zeros((Bp, hp), compute_dtype).at[:batch, :hidden_length].set(
        h0.astype(compute_dtype))
    c_p = jnp.zeros((Bp, hp), jnp.float32).at[:batch, :hidden_length].set(c0)
    h_pk, c_pk = lstm_cell_ref_packed(x_p, h_p, c_p, packed["wx"], packed["wh"],
                                      packed["wc"], packed["b"])
    assert jnp.allclose(h1.astype(jnp.float32),
                        h_pk[:batch, :hidden_length].astype(jnp.float32),
                        atol=1e-2, rtol=1e-2)
    assert jnp.allclose(c1, c_pk[:batch, :hidden_length], atol=1e-2, rtol=1e-2)

    # loose check against the f32 module math (bf16 weight rounding)
    h_f, c_f = lstm_ref(x_seq[0], h0, c0, params)
    assert jnp.allclose(h1.astype(jnp.float32), h_f, atol=5e-2, rtol=5e-2)
    assert jnp.allclose(c1, c_f, atol=5e-2, rtol=5e-2)

    # ---- whole sequence in a single pallas_call (weights resident) ---------
    seq = jax.jit(lstm_sequence_forward)
    h_seq_out, c_T = seq(x_seq, h0, c0, packed)
    jax.block_until_ready((h_seq_out, c_T))

    x_seq_p = jnp.zeros((seq_len, Bp, Dp), compute_dtype).at[:, :batch, :input_length].set(
        x_seq.astype(compute_dtype))
    h_seq_pk, c_T_pk = lstm_seq_ref_packed(x_seq_p, h_p, c_p, packed["wx"], packed["wh"],
                                           packed["wc"], packed["b"])
    assert jnp.allclose(h_seq_out.astype(jnp.float32),
                        h_seq_pk[:, :batch, :hidden_length].astype(jnp.float32),
                        atol=2e-2, rtol=2e-2)
    assert jnp.allclose(c_T, c_T_pk[:batch, :hidden_length], atol=2e-2, rtol=2e-2)
    # step 0 of the sequence kernel must match the single-step cell
    assert jnp.allclose(h_seq_out[0].astype(jnp.float32), h1.astype(jnp.float32),
                        atol=1e-2, rtol=1e-2)

    print("KERNEL_OK")
</pallas_src>

<mosaic_0001>
module attributes {stable_mosaic.version = 11 : i64} {
  func.func @_lstm_cell_kernel(%arg0: i32, %arg1: memref<16x128xbf16, #tpu.memory_space<vmem>>, %arg2: memref<16x128xbf16, #tpu.memory_space<vmem>>, %arg3: memref<16x128xf32, #tpu.memory_space<vmem>>, %arg4: memref<128x512xbf16, #tpu.memory_space<vmem>>, %arg5: memref<128x512xbf16, #tpu.memory_space<vmem>>, %arg6: memref<128x384xbf16, #tpu.memory_space<vmem>>, %arg7: memref<1x512xf32, #tpu.memory_space<vmem>>, %arg8: memref<16x128xbf16, #tpu.memory_space<vmem>>, %arg9: memref<16x128xf32, #tpu.memory_space<vmem>>) attributes {dimension_semantics = [#tpu.dimension_semantics<parallel>], iteration_bounds = array<i64: 1>, scalar_prefetch = 0 : i64, scratch_operands = 0 : i64, tpu.core_type = #tpu.core_type<tc>, window_params = [{transform_indices = @transform_0, window_bounds = array<i64: 16, 128>}, {transform_indices = @transform_1, window_bounds = array<i64: 16, 128>}, {transform_indices = @transform_2, window_bounds = array<i64: 16, 128>}, {pipeline_mode = #tpu.pipeline_mode<synchronous>, transform_indices = @transform_3, window_bounds = array<i64: 128, 512>}, {pipeline_mode = #tpu.pipeline_mode<synchronous>, transform_indices = @transform_4, window_bounds = array<i64: 128, 512>}, {pipeline_mode = #tpu.pipeline_mode<synchronous>, transform_indices = @transform_5, window_bounds = array<i64: 128, 384>}, {pipeline_mode = #tpu.pipeline_mode<synchronous>, transform_indices = @transform_6, window_bounds = array<i64: 1, 512>}, {transform_indices = @transform_7, window_bounds = array<i64: 16, 128>}, {transform_indices = @transform_8, window_bounds = array<i64: 16, 128>}]} {
    %c0 = arith.constant 0 : index
    %c0_0 = arith.constant 0 : index
    %0 = vector.load %arg1[%c0, %c0_0] : memref<16x128xbf16, #tpu.memory_space<vmem>>, vector<16x128xbf16>
    %c0_1 = arith.constant 0 : index
    %c0_2 = arith.constant 0 : index
    %1 = vector.load %arg2[%c0_1, %c0_2] : memref<16x128xbf16, #tpu.memory_space<vmem>>, vector<16x128xbf16>
    %c0_3 = arith.constant 0 : index
    %c0_4 = arith.constant 0 : index
    %2 = vector.load %arg3[%c0_3, %c0_4] : memref<16x128xf32, #tpu.memory_space<vmem>>, vector<16x128xf32>
    %c0_5 = arith.constant 0 : index
    %c0_6 = arith.constant 0 : index
    %3 = vector.load %arg4[%c0_5, %c0_6] : memref<128x512xbf16, #tpu.memory_space<vmem>>, vector<128x512xbf16>
    %c0_7 = arith.constant 0 : index
    %c0_8 = arith.constant 0 : index
    %4 = vector.load %arg5[%c0_7, %c0_8] : memref<128x512xbf16, #tpu.memory_space<vmem>>, vector<128x512xbf16>
    %c0_9 = arith.constant 0 : index
    %c0_10 = arith.constant 0 : index
    %5 = vector.load %arg6[%c0_9, %c0_10] : memref<128x384xbf16, #tpu.memory_space<vmem>>, vector<128x384xbf16>
    %c0_11 = arith.constant 0 : index
    %c0_12 = arith.constant 0 : index
    %6 = vector.load %arg7[%c0_11, %c0_12] : memref<1x512xf32, #tpu.memory_space<vmem>>, vector<1x512xf32>
    %cst = arith.constant dense<0.000000e+00> : vector<16x512xf32>
    %7 = tpu.matmul %0, %3, %cst {dimension_numbers = #tpu.dot_dimension_numbers<[1], [0], [0], [1], [0, 0, 1, 1], [], []>} : vector<16x128xbf16>, vector<128x512xbf16>, vector<16x512xf32> -> vector<16x512xf32>
    %cst_13 = arith.constant dense<0.000000e+00> : vector<16x512xf32>
    %8 = tpu.matmul %1, %4, %cst_13 {dimension_numbers = #tpu.dot_dimension_numbers<[1], [0], [0], [1], [0, 0, 1, 1], [], []>} : vector<16x128xbf16>, vector<128x512xbf16>, vector<16x512xf32> -> vector<16x512xf32>
    %9 = arith.addf %7, %8 : vector<16x512xf32>
    %10 = vector.broadcast %6 : vector<1x512xf32> to vector<16x512xf32>
    %11 = arith.addf %9, %10 : vector<16x512xf32>
    %12 = arith.truncf %2 : vector<16x128xf32> to vector<16x128xbf16>
    %cst_14 = arith.constant dense<0.000000e+00> : vector<16x384xf32>
    %13 = tpu.matmul %12, %5, %cst_14 {dimension_numbers = #tpu.dot_dimension_numbers<[1], [0], [0], [1], [0, 0, 1, 1], [], []>} : vector<16x128xbf16>, vector<128x384xbf16>, vector<16x384xf32> -> vector<16x384xf32>
    %14 = vector.extract_strided_slice %11 {offsets = [0, 0], sizes = [16, 384], strides = [1, 1]} : vector<16x512xf32> to vector<16x384xf32>
    %15 = arith.addf %14, %13 : vector<16x384xf32>
    %cst_15 = arith.constant 5.000000e-01 : f32
    %16 = vector.broadcast %cst_15 : f32 to vector<16x384xf32>
    %17 = arith.mulf %16, %15 : vector<16x384xf32>
    %18 = math.tanh %17 : vector<16x384xf32>
    %cst_16 = arith.constant 5.000000e-01 : f32
    %19 = vector.broadcast %cst_16 : f32 to vector<16x384xf32>
    %20 = arith.mulf %19, %18 : vector<16x384xf32>
    %cst_17 = arith.constant 5.000000e-01 : f32
    %21 = vector.broadcast %cst_17 : f32 to vector<16x384xf32>
    %22 = arith.addf %20, %21 : vector<16x384xf32>
    %23 = vector.extract_strided_slice %11 {offsets = [0, 384], sizes = [16, 128], strides = [1, 1]} : vector<16x512xf32> to vector<16x128xf32>
    %24 = math.tanh %23 : vector<16x128xf32>
    %25 = vector.extract_strided_slice %22 {offsets = [0, 0], sizes = [16, 128], strides = [1, 1]} : vector<16x384xf32> to vector<16x128xf32>
    %26 = vector.extract_strided_slice %22 {offsets = [0, 128], sizes = [16, 128], strides = [1, 1]} : vector<16x384xf32> to vector<16x128xf32>
    %27 = vector.extract_strided_slice %22 {offsets = [0, 256], sizes = [16, 128], strides = [1, 1]} : vector<16x384xf32> to vector<16x128xf32>
    %28 = arith.mulf %24, %25 : vector<16x128xf32>
    %29 = arith.mulf %26, %2 : vector<16x128xf32>
    %30 = arith.addf %28, %29 : vector<16x128xf32>
    %31 = math.tanh %30 : vector<16x128xf32>
    %32 = arith.mulf %27, %31 : vector<16x128xf32>
    %33 = arith.truncf %32 : vector<16x128xf32> to vector<16x128xbf16>
    %c0_18 = arith.constant 0 : index
    %c0_19 = arith.constant 0 : index
    %34 = vector.load %arg8[%c0_18, %c0_19] : memref<16x128xbf16, #tpu.memory_space<vmem>>, vector<16x128xbf16>
    tpu.vector_store %arg8[%c0_18, %c0_19], %33 {strides = array<i32>} : memref<16x128xbf16, #tpu.memory_space<vmem>>, vector<16x128xbf16>,
    %c0_20 = arith.constant 0 : index
    %c0_21 = arith.constant 0 : index
    %35 = vector.load %arg9[%c0_20, %c0_21] : memref<16x128xf32, #tpu.memory_space<vmem>>, vector<16x128xf32>
    tpu.vector_store %arg9[%c0_20, %c0_21], %30 {strides = array<i32>} : memref<16x128xf32, #tpu.memory_space<vmem>>, vector<16x128xf32>,
    return
  }
  func.func @transform_0(%arg0: i32) -> (i32, i32) {
    %c0_i32 = arith.constant 0 : i32
    %c0_i32_0 = arith.constant 0 : i32
    return %arg0, %c0_i32 : i32, i32
  }
  func.func @transform_1(%arg0: i32) -> (i32, i32) {
    %c0_i32 = arith.constant 0 : i32
    %c0_i32_0 = arith.constant 0 : i32
    return %arg0, %c0_i32 : i32, i32
  }
  func.func @transform_2(%arg0: i32) -> (i32, i32) {
    %c0_i32 = arith.constant 0 : i32
    %c0_i32_0 = arith.constant 0 : i32
    return %arg0, %c0_i32 : i32, i32
  }
  func.func @transform_3(%arg0: i32) -> (i32, i32) {
    %c0_i32 = arith.constant 0 : i32
    %c0_i32_0 = arith.constant 0 : i32
    %c0_i32_1 = arith.constant 0 : i32
    return %c0_i32, %c0_i32_0 : i32, i32
  }
  func.func @transform_4(%arg0: i32) -> (i32, i32) {
    %c0_i32 = arith.constant 0 : i32
    %c0_i32_0 = arith.constant 0 : i32
    %c0_i32_1 = arith.constant 0 : i32
    return %c0_i32, %c0_i32_0 : i32, i32
  }
  func.func @transform_5(%arg0: i32) -> (i32, i32) {
    %c0_i32 = arith.constant 0 : i32
    %c0_i32_0 = arith.constant 0 : i32
    %c0_i32_1 = arith.constant 0 : i32
    return %c0_i32, %c0_i32_0 : i32, i32
  }
  func.func @transform_6(%arg0: i32) -> (i32, i32) {
    %c0_i32 = arith.constant 0 : i32
    %c0_i32_0 = arith.constant 0 : i32
    %c0_i32_1 = arith.constant 0 : i32
    return %c0_i32, %c0_i32_0 : i32, i32
  }
  func.func @transform_7(%arg0: i32) -> (i32, i32) {
    %c0_i32 = arith.constant 0 : i32
    %c0_i32_0 = arith.constant 0 : i32
    return %arg0, %c0_i32 : i32, i32
  }
  func.func @transform_8(%arg0: i32) -> (i32, i32) {
    %c0_i32 = arith.constant 0 : i32
    %c0_i32_0 = arith.constant 0 : i32
    return %arg0, %c0_i32 : i32, i32
  }
}

</mosaic_0001>

<llo_original>
// kernel: lstm_cell_forward.1
$region0: #{lstm_cell_forward.1}
  #allocation0 [shape = 'u32[]', space=smem, size = 0x4, offset = 0x4, fixed_abs, tag = 'smem constant byte address 0x4 - core index']
  #allocation1 [shape = 'u32[144,128]{1,0:T(1,128)}', space=vmem, size = 0x12000, scoped, tag = 'internal scratch']
  %s0 = inlined_call_operand.vmem [shape: bf16[16,128], index: 0, kind: input, shape index: {}]
  %s1 = inlined_call_operand.vmem [shape: bf16[16,128], index: 1, kind: input, shape index: {}]
  %s2 = inlined_call_operand.vmem [shape: f32[16,128], index: 2, kind: input, shape index: {}]
  %s3 = inlined_call_operand.hbm [shape: bf16[128,512], index: 3, kind: input, shape index: {}]
  %s4 = inlined_call_operand.hbm [shape: bf16[128,512], index: 4, kind: input, shape index: {}]
  %s5 = inlined_call_operand.hbm [shape: bf16[128,384], index: 5, kind: input, shape index: {}]
  %s6 = inlined_call_operand.vmem [shape: f32[1,512], index: 6, kind: input, shape index: {}]
  %s7 = inlined_call_operand.vmem [shape: bf16[16,128], index: 7, kind: output, shape index: {0}]
  %s8 = inlined_call_operand.vmem [shape: f32[16,128], index: 8, kind: output, shape index: {1}]
  %9 = xla_tuple %s7, %s8
  %s10 = sld [smem:[#allocation0]]
  $region58: #{lstm_cell_forward.1} parent=0
    _
  %s12 = ssub.s32 1, %s10
  %s13 = scalar_select 0, %s12, %s10
  $region1: #{lstm_cell_forward.1} parent=0
    #allocation2 [shape = 'u8[131072]{0}', space=vmem, size = 0x20000, scoped, tag = 'input window, operand 3, single buffered']
    #allocation3 [shape = 's32[1]{0}', space=sflag, size = 0x4, scoped, tag = 'scoped memory for lstm_cell_forward.1']
    #allocation4 [shape = 'u8[131072]{0}', space=vmem, size = 0x20000, scoped, tag = 'input window, operand 4, single buffered']
    #allocation5 [shape = 's32[1]{0}', space=sflag, size = 0x4, scoped, tag = 'scoped memory for lstm_cell_forward.1']
    #allocation6 [shape = 'u8[98304]{0}', space=vmem, size = 0x18000, scoped, tag = 'input window, operand 5, single buffered']
    %14 = vsyncpa [#allocation3], 0
    %15 = vsyncpa [#allocation5], 0
    // Predicated region
    $region2: #{lstm_cell_forward.1} parent=1 // pred_check
      _
    $region3: #{lstm_cell_forward.1} parent=1 // pred_check_branch
      %17 = sbr.rel (0) target = $region5
    $region4: #{lstm_cell_forward.1} parent=1 // pred_region
      _
    $region5: #{lstm_cell_forward.1} parent=1 // pred_fallthru
      _
    // Predicated region
    $region6: #{lstm_cell_forward.1} parent=1 // pred_check
      _
    $region7: #{lstm_cell_forward.1} parent=1 // pred_check_branch
      %19 = sbr.rel (0) target = $region9
    $region8: #{lstm_cell_forward.1} parent=1 // pred_region
      _
    $region9: #{lstm_cell_forward.1} parent=1 // pred_fallthru
      _
    // Predicated region
    $region10: #{lstm_cell_forward.1} parent=1 // pred_check
      _
    $region11: #{lstm_cell_forward.1} parent=1 // pred_check_branch
      %21 = sbr.rel (0) target = $region13
    $region12: #{lstm_cell_forward.1} parent=1 // pred_region
      _
    $region13: #{lstm_cell_forward.1} parent=1 // pred_fallthru
      _
    // Predicated region
    $region14: #{lstm_cell_forward.1} parent=1 // pred_check
      _
    $region15: #{lstm_cell_forward.1} parent=1 // pred_check_branch
      %23 = sbr.rel (0) target = $region17
    $region16: #{lstm_cell_forward.1} parent=1 // pred_region
      %s25 = ssub.s32 4096, 4096
      %26 = vsyncadd [#allocation3], %s25
      %s27 = sshll.u32 [#allocation2], 4
      %s28 = int_to_ptr.vmem [resolvable:$true] %s27
      %33 = dma.hbm_to_vmem [thread:$0]  %s3, 4096, %s28, [#allocation3], 256, 256, 16
    $region17: #{lstm_cell_forward.1} parent=1 // pred_fallthru
      _
    // Predicated region
    $region18: #{lstm_cell_forward.1} parent=1 // pred_check
      _
    $region19: #{lstm_cell_forward.1} parent=1 // pred_check_branch
      %35 = sbr.rel (0) target = $region21
    $region20: #{lstm_cell_forward.1} parent=1 // pred_region
      %s37 = ssub.s32 4096, 4096
      %38 = vsyncadd [#allocation5], %s37
      %s39 = sshll.u32 [#allocation4], 4
      %s40 = int_to_ptr.vmem [resolvable:$true] %s39
      %45 = dma.hbm_to_vmem [thread:$0]  %s4, 4096, %s40, [#allocation5], 256, 256, 16
    $region21: #{lstm_cell_forward.1} parent=1 // pred_fallthru
      _
    // Predicated region
    $region22: #{lstm_cell_forward.1} parent=1 // pred_check
      _
    $region23: #{lstm_cell_forward.1} parent=1 // pred_check_branch
      %47 = sbr.rel (0) target = $region25
    $region24: #{lstm_cell_forward.1} parent=1 // pred_region
      %s49 = ssub.s32 3072, 3072
      %50 = vsyncadd [#allocation5], %s49
      %s51 = sshll.u32 [#allocation6], 4
      %s52 = int_to_ptr.vmem [resolvable:$true] %s51
      %57 = dma.hbm_to_vmem [thread:$0]  %s5, 3072, %s52, [#allocation5], 192, 192, 12
    $region25: #{lstm_cell_forward.1} parent=1 // pred_fallthru
      _
    // Predicated region
    $region26: #{lstm_cell_forward.1} parent=1 // pred_check
      _
    $region27: #{lstm_cell_forward.1} parent=1 // pred_check_branch
      %59 = sbr.rel (0) target = $region29
    $region28: #{lstm_cell_forward.1} parent=1 // pred_region
      _
    $region29: #{lstm_cell_forward.1} parent=1 // pred_fallthru
      _
    // Predicated region
    $region30: #{lstm_cell_forward.1} parent=1 // pred_check
      _
    $region31: #{lstm_cell_forward.1} parent=1 // pred_check_branch
      %61 = sbr.rel (0) target = $region33
    $region32: #{lstm_cell_forward.1} parent=1 // pred_region
      %62 = dma.done [#allocation3], 4096
    $region33: #{lstm_cell_forward.1} parent=1 // pred_fallthru
      _
    // Predicated region
    $region34: #{lstm_cell_forward.1} parent=1 // pred_check
      _
    $region35: #{lstm_cell_forward.1} parent=1 // pred_check_branch
      %64 = sbr.rel (0) target = $region37
    $region36: #{lstm_cell_forward.1} parent=1 // pred_region
      %65 = dma.done [#allocation5], 4096
    $region37: #{lstm_cell_forward.1} parent=1 // pred_fallthru
      _
    // Predicated region
    $region38: #{lstm_cell_forward.1} parent=1 // pred_check
      _
    $region39: #{lstm_cell_forward.1} parent=1 // pred_check_branch
      %67 = sbr.rel (0) target = $region41
    $region40: #{lstm_cell_forward.1} parent=1 // pred_region
      %68 = dma.done [#allocation5], 3072
    $region41: #{lstm_cell_forward.1} parent=1 // pred_fallthru
      _
    %v70 = vld [vmem:[%s0] sm:$0xf]
    %v71 = vld [vmem:[%s0 + $0x4] sm:$0xf]
    %v72 = vld [vmem:[%s1] sm:$0xf]
    %v73 = vld [vmem:[%s1 + $0x4] sm:$0xf]
    %v74 = vld [vmem:[%s2] sm:$0xff]
    %v75 = vld [vmem:[%s2 + $0x8] sm:$0xff]
    %v76 = vld [vmem:[#allocation2] sm:$0xff]
    %v77 = vld [vmem:[#allocation2 + $0x8] sm:$0xff]
    %v78 = vld [vmem:[#allocation2 + $0x10] sm:$0xff]
    %v79 = vld [vmem:[#allocation2 + $0x18] sm:$0xff]
    %v80 = vld [vmem:[#allocation2 + $0x20] sm:$0xff]
    %v81 = vld [vmem:[#allocation2 + $0x28] sm:$0xff]
    %v82 = vld [vmem:[#allocation2 + $0x30] sm:$0xff]
    %v83 = vld [vmem:[#allocation2 + $0x38] sm:$0xff]
    %v84 = vld [vmem:[#allocation2 + $0x40] sm:$0xff]
    %v85 = vld [vmem:[#allocation2 + $0x48] sm:$0xff]
    %v86 = vld [vmem:[#allocation2 + $0x50] sm:$0xff]
    %v87 = vld [vmem:[#allocation2 + $0x58] sm:$0xff]
    %v88 = vld [vmem:[#allocation2 + $0x60] sm:$0xff]
    %v89 = vld [vmem:[#allocation2 + $0x68] sm:$0xff]
    %v90 = vld [vmem:[#allocation2 + $0x70] sm:$0xff]
    %v91 = vld [vmem:[#allocation2 + $0x78] sm:$0xff]
    %v92 = vld [vmem:[#allocation2 + $0x80] sm:$0xff]
    %v93 = vld [vmem:[#allocation2 + $0x88] sm:$0xff]
    %v94 = vld [vmem:[#allocation2 + $0x90] sm:$0xff]
    %v95 = vld [vmem:[#allocation2 + $0x98] sm:$0xff]
    %v96 = vld [vmem:[#allocation2 + $0xa0] sm:$0xff]
    %v97 = vld [vmem:[#allocation2 + $0xa8] sm:$0xff]
    %v98 = vld [vmem:[#allocation2 + $0xb0] sm:$0xff]
    %v99 = vld [vmem:[#allocation2 + $0xb8] sm:$0xff]
    %v100 = vld [vmem:[#allocation2 + $0xc0] sm:$0xff]
    %v101 = vld [vmem:[#allocation2 + $0xc8] sm:$0xff]
    %v102 = vld [vmem:[#allocation2 + $0xd0] sm:$0xff]
    %v103 = vld [vmem:[#allocation2 + $0xd8] sm:$0xff]
    %v104 = vld [vmem:[#allocation2 + $0xe0] sm:$0xff]
    %v105 = vld [vmem:[#allocation2 + $0xe8] sm:$0xff]
    %v106 = vld [vmem:[#allocation2 + $0xf0] sm:$0xff]
    %v107 = vld [vmem:[#allocation2 + $0xf8] sm:$0xff]
    %v108 = vld [vmem:[#allocation4] sm:$0xff]
    %v109 = vld [vmem:[#allocation4 + $0x8] sm:$0xff]
    %v110 = vld [vmem:[#allocation4 + $0x10] sm:$0xff]
    %v111 = vld [vmem:[#allocation4 + $0x18] sm:$0xff]
    %v112 = vld [vmem:[#allocation4 + $0x20] sm:$0xff]
    %v113 = vld [vmem:[#allocation4 + $0x28] sm:$0xff]
    %v114 = vld [vmem:[#allocation4 + $0x30] sm:$0xff]
    %v115 = vld [vmem:[#allocation4 + $0x38] sm:$0xff]
    %v116 = vld [vmem:[#allocation4 + $0x40] sm:$0xff]
    %v117 = vld [vmem:[#allocation4 + $0x48] sm:$0xff]
    %v118 = vld [vmem:[#allocation4 + $0x50] sm:$0xff]
    %v119 = vld [vmem:[#allocation4 + $0x58] sm:$0xff]
    %v120 = vld [vmem:[#allocation4 + $0x60] sm:$0xff]
    %v121 = vld [vmem:[#allocation4 + $0x68] sm:$0xff]
    %v122 = vld [vmem:[#allocation4 + $0x70] sm:$0xff]
    %v123 = vld [vmem:[#allocation4 + $0x78] sm:$0xff]
    %v124 = vld [vmem:[#allocation4 + $0x80] sm:$0xff]
    %v125 = vld [vmem:[#allocation4 + $0x88] sm:$0xff]
    %v126 = vld [vmem:[#allocation4 + $0x90] sm:$0xff]
    %v127 = vld [vmem:[#allocation4 + $0x98] sm:$0xff]
    %v128 = vld [vmem:[#allocation4 + $0xa0] sm:$0xff]
    %v129 = vld [vmem:[#allocation4 + $0xa8] sm:$0xff]
    %v130 = vld [vmem:[#allocation4 + $0xb0] sm:$0xff]
    %v131 = vld [vmem:[#allocation4 + $0xb8] sm:$0xff]
    %v132 = vld [vmem:[#allocation4 + $0xc0] sm:$0xff]
    %v133 = vld [vmem:[#allocation4 + $0xc8] sm:$0xff]
    %v134 = vld [vmem:[#allocation4 + $0xd0] sm:$0xff]
    %v135 = vld [vmem:[#allocation4 + $0xd8] sm:$0xff]
    %v136 = vld [vmem:[#allocation4 + $0xe0] sm:$0xff]
    %v137 = vld [vmem:[#allocation4 + $0xe8] sm:$0xff]
    %v138 = vld [vmem:[#allocation4 + $0xf0] sm:$0xff]
    %v139 = vld [vmem:[#allocation4 + $0xf8] sm:$0xff]
    %v140 = vld [vmem:[#allocation6] sm:$0xff]
    %v141 = vld [vmem:[#allocation6 + $0x8] sm:$0xf]
    %v142 = vld [vmem:[#allocation6 + $0xc] sm:$0xff]
    %v143 = vld [vmem:[#allocation6 + $0x14] sm:$0xf]
    %v144 = vld [vmem:[#allocation6 + $0x18] sm:$0xff]
    %v145 = vld [vmem:[#allocation6 + $0x20] sm:$0xf]
    %v146 = vld [vmem:[#allocation6 + $0x24] sm:$0xff]
    %v147 = vld [vmem:[#allocation6 + $0x2c] sm:$0xf]
    %v148 = vld [vmem:[#allocation6 + $0x30] sm:$0xff]
    %v149 = vld [vmem:[#allocation6 + $0x38] sm:$0xf]
    %v150 = vld [vmem:[#allocation6 + $0x3c] sm:$0xff]
    %v151 = vld [vmem:[#allocation6 + $0x44] sm:$0xf]
    %v152 = vld [vmem:[#allocation6 + $0x48] sm:$0xff]
    %v153 = vld [vmem:[#allocation6 + $0x50] sm:$0xf]
    %v154 = vld [vmem:[#allocation6 + $0x54] sm:$0xff]
    %v155 = vld [vmem:[#allocation6 + $0x5c] sm:$0xf]
    %v156 = vld [vmem:[#allocation6 + $0x60] sm:$0xff]
    %v157 = vld [vmem:[#allocation6 + $0x68] sm:$0xf]
    %v158 = vld [vmem:[#allocation6 + $0x6c] sm:$0xff]
    %v159 = vld [vmem:[#allocation6 + $0x74] sm:$0xf]
    %v160 = vld [vmem:[#allocation6 + $0x78] sm:$0xff]
    %v161 = vld [vmem:[#allocation6 + $0x80] sm:$0xf]
    %v162 = vld [vmem:[#allocation6 + $0x84] sm:$0xff]
    %v163 = vld [vmem:[#allocation6 + $0x8c] sm:$0xf]
    %v164 = vld [vmem:[#allocation6 + $0x90] sm:$0xff]
    %v165 = vld [vmem:[#allocation6 + $0x98] sm:$0xf]
    %v166 = vld [vmem:[#allocation6 + $0x9c] sm:$0xff]
    %v167 = vld [vmem:[#allocation6 + $0xa4] sm:$0xf]
    %v168 = vld [vmem:[#allocation6 + $0xa8] sm:$0xff]
    %v169 = vld [vmem:[#allocation6 + $0xb0] sm:$0xf]
    %v170 = vld [vmem:[#allocation6 + $0xb4] sm:$0xff]
    %v171 = vld [vmem:[#allocation6 + $0xbc] sm:$0xf]
    %v172 = vld [vmem:[%s6] sm:$0xf]
    %v175 = vunpack.c.l.b16 %v72
    %v176 = vunpack.c.l.b16 %v73
    %v177 = vpack.c.b16 %v176, %v175
    %v211 = vunpack.c.l.b16 %v108
    %v212 = vunpack.c.h.b16 %v108
    %v213 = vunpack.c.l.b16 %v109
    %v214 = vunpack.c.h.b16 %v109
    %v215 = vunpack.c.l.b16 %v110
    %v216 = vunpack.c.h.b16 %v110
    %v217 = vunpack.c.l.b16 %v111
    %v218 = vunpack.c.h.b16 %v111
    %v219 = vunpack.c.l.b16 %v112
    %v220 = vunpack.c.h.b16 %v112
    %v221 = vunpack.c.l.b16 %v113
    %v222 = vunpack.c.h.b16 %v113
    %v223 = vunpack.c.l.b16 %v114
    %v224 = vunpack.c.h.b16 %v114
    %v225 = vunpack.c.l.b16 %v115
    %v226 = vunpack.c.h.b16 %v115
    %v227 = vunpack.c.l.b16 %v116
    %v228 = vunpack.c.h.b16 %v116
    %v229 = vunpack.c.l.b16 %v117
    %v230 = vunpack.c.h.b16 %v117
    %v231 = vunpack.c.l.b16 %v118
    %v232 = vunpack.c.h.b16 %v118
    %v233 = vunpack.c.l.b16 %v119
    %v234 = vunpack.c.h.b16 %v119
    %v235 = vunpack.c.l.b16 %v120
    %v236 = vunpack.c.h.b16 %v120
    %v237 = vunpack.c.l.b16 %v121
    %v238 = vunpack.c.h.b16 %v121
    %v239 = vunpack.c.l.b16 %v122
    %v240 = vunpack.c.h.b16 %v122
    %v241 = vunpack.c.l.b16 %v123
    %v242 = vunpack.c.h.b16 %v123
    %v243 = vunpack.c.l.b16 %v124
    %v244 = vunpack.c.h.b16 %v124
    %v245 = vunpack.c.l.b16 %v125
    %v246 = vunpack.c.h.b16 %v125
    %v247 = vunpack.c.l.b16 %v126
    %v248 = vunpack.c.h.b16 %v126
    %v249 = vunpack.c.l.b16 %v127
    %v250 = vunpack.c.h.b16 %v127
    %v251 = vunpack.c.l.b16 %v128
    %v252 = vunpack.c.h.b16 %v128
    %v253 = vunpack.c.l.b16 %v129
    %v254 = vunpack.c.h.b16 %v129
    %v255 = vunpack.c.l.b16 %v130
    %v256 = vunpack.c.h.b16 %v130
    %v257 = vunpack.c.l.b16 %v131
    %v258 = vunpack.c.h.b16 %v131
    %v259 = vunpack.c.l.b16 %v132
    %v260 = vunpack.c.h.b16 %v132
    %v261 = vunpack.c.l.b16 %v133
    %v262 = vunpack.c.h.b16 %v133
    %v263 = vunpack.c.l.b16 %v134
    %v264 = vunpack.c.h.b16 %v134
    %v265 = vunpack.c.l.b16 %v135
    %v266 = vunpack.c.h.b16 %v135
    %v267 = vunpack.c.l.b16 %v136
    %v268 = vunpack.c.h.b16 %v136
    %v269 = vunpack.c.l.b16 %v137
    %v270 = vunpack.c.h.b16 %v137
    %v271 = vunpack.c.l.b16 %v138
    %v272 = vunpack.c.h.b16 %v138
    %v273 = vunpack.c.l.b16 %v139
    %v274 = vunpack.c.h.b16 %v139
    %v275 = vpack.c.b16 %v215, %v211
    %v276 = vpack.c.b16 %v216, %v212
    %v277 = vpack.c.b16 %v217, %v213
    %v278 = vpack.c.b16 %v218, %v214
    %v279 = vpack.c.b16 %v223, %v219
    %v280 = vpack.c.b16 %v224, %v220
    %v281 = vpack.c.b16 %v225, %v221
    %v282 = vpack.c.b16 %v226, %v222
    %v283 = vpack.c.b16 %v231, %v227
    %v284 = vpack.c.b16 %v232, %v228
    %v285 = vpack.c.b16 %v233, %v229
    %v286 = vpack.c.b16 %v234, %v230
    %v287 = vpack.c.b16 %v239, %v235
    %v288 = vpack.c.b16 %v240, %v236
    %v289 = vpack.c.b16 %v241, %v237
    %v290 = vpack.c.b16 %v242, %v238
    %v291 = vpack.c.b16 %v247, %v243
    %v292 = vpack.c.b16 %v248, %v244
    %v293 = vpack.c.b16 %v249, %v245
    %v294 = vpack.c.b16 %v250, %v246
    %v295 = vpack.c.b16 %v255, %v251
    %v296 = vpack.c.b16 %v256, %v252
    %v297 = vpack.c.b16 %v257, %v253
    %v298 = vpack.c.b16 %v258, %v254
    %v299 = vpack.c.b16 %v263, %v259
    %v300 = vpack.c.b16 %v264, %v260
    %v301 = vpack.c.b16 %v265, %v261
    %v302 = vpack.c.b16 %v266, %v262
    %v303 = vpack.c.b16 %v271, %v267
    %v304 = vpack.c.b16 %v272, %v268
    %v305 = vpack.c.b16 %v273, %v269
    %v306 = vpack.c.b16 %v274, %v270
    %339 = vmatprep.subr.bf16.mxu0 %v276
    %340 = vmatpush1.bf16.msra.mxu0 %v275
    %341 = vmatprep.subr.bf16.mxu0 %v280
    %342 = vmatpush1.bf16.msra.mxu0 %v279
    %343 = vmatprep.subr.bf16.mxu0 %v284
    %344 = vmatpush1.bf16.msra.mxu0 %v283
    %345 = vmatprep.subr.bf16.mxu0 %v288
    %346 = vmatpush1.bf16.msra.mxu0 %v287
    %347 = vmatprep.subr.bf16.mxu0 %v292
    %348 = vmatpush1.bf16.msra.mxu0 %v291
    %349 = vmatprep.subr.bf16.mxu0 %v296
    %350 = vmatpush1.bf16.msra.mxu0 %v295
    %351 = vmatprep.subr.bf16.mxu0 %v300
    %352 = vmatpush1.bf16.msra.mxu0 %v299
    %353 = vmatprep.subr.bf16.mxu0 %v304
    %354 = vmatpush1.bf16.msra.mxu0 %v303
    %355 = vmatprep.subr.bf16.mxu0 0
    %356 = vmatpush1.bf16.msra.mxu0 0
    %357 = vmatprep.subr.bf16.mxu0 0
    %358 = vmatpush1.bf16.msra.mxu0 0
    %359 = vmatprep.subr.bf16.mxu0 0
    %360 = vmatpush1.bf16.msra.mxu0 0
    %361 = vmatprep.subr.bf16.mxu0 0
    %362 = vmatpush1.bf16.msra.mxu0 0
    %363 = vmatprep.subr.bf16.mxu0 0
    %364 = vmatpush1.bf16.msra.mxu0 0
    %365 = vmatprep.subr.bf16.mxu0 0
    %366 = vmatpush1.bf16.msra.mxu0 0
    %367 = vmatprep.subr.bf16.mxu0 0
    %368 = vmatpush1.bf16.msra.mxu0 0
    %369 = vmatprep.subr.bf16.mxu0 0
    %370 = vmatpush1.bf16.msra.mxu0 0
    %371 = vmatprep.mubr.bf16.mxu0 0
    %372 = vmatmul.mubr.bf16.gmra.mrb[0].mxu0 %v177
    %v373 = vpop.f32.mrb[0].mxu0
    %v374 = vadd.f32 0.0, %v373
    %v375 = vpop.f32.mrb[0].mxu0
    %v376 = vadd.f32 0.0, %v375
    %v377 = vpop.f32.mrb[0].mxu0
    %v378 = vadd.f32 0.0, %v377
    %v379 = vpop.f32.mrb[0].mxu0
    %v380 = vadd.f32 0.0, %v379
    %381 = vdwg.mxu0
    %382 = vmatprep.subr.bf16.mxu0 %v278
    %383 = vmatpush1.bf16.msra.mxu0 %v277
    %384 = vmatprep.subr.bf16.mxu0 %v282
    %385 = vmatpush1.bf16.msra.mxu0 %v281
    %386 = vmatprep.subr.bf16.mxu0 %v286
    %387 = vmatpush1.bf16.msra.mxu0 %v285
    %388 = vmatprep.subr.bf16.mxu0 %v290
    %389 = vmatpush1.bf16.msra.mxu0 %v289
    %390 = vmatprep.subr.bf16.mxu0 %v294
    %391 = vmatpush1.bf16.msra.mxu0 %v293
    %392 = vmatprep.subr.bf16.mxu0 %v298
    %393 = vmatpush1.bf16.msra.mxu0 %v297
    %394 = vmatprep.subr.bf16.mxu0 %v302
    %395 = vmatpush1.bf16.msra.mxu0 %v301
    %396 = vmatprep.subr.bf16.mxu0 %v306
    %397 = vmatpush1.bf16.msra.mxu0 %v305
    %398 = vmatprep.subr.bf16.mxu0 0
    %399 = vmatpush1.bf16.msra.mxu0 0
    %400 = vmatprep.subr.bf16.mxu0 0
    %401 = vmatpush1.bf16.msra.mxu0 0
    %402 = vmatprep.subr.bf16.mxu0 0
    %403 = vmatpush1.bf16.msra.mxu0 0
    %404 = vmatprep.subr.bf16.mxu0 0
    %405 = vmatpush1.bf16.msra.mxu0 0
    %406 = vmatprep.subr.bf16.mxu0 0
    %407 = vmatpush1.bf16.msra.mxu0 0
    %408 = vmatprep.subr.bf16.mxu0 0
    %409 = vmatpush1.bf16.msra.mxu0 0
    %410 = vmatprep.subr.bf16.mxu0 0
    %411 = vmatpush1.bf16.msra.mxu0 0
    %412 = vmatprep.subr.bf16.mxu0 0
    %413 = vmatpush1.bf16.msra.mxu0 0
    %414 = vmatprep.mubr.bf16.mxu0 0
    %415 = vmatmul.mubr.bf16.gmra.mrb[0].mxu0 %v177
    %v416 = vpop.f32.mrb[0].mxu0
    %v417 = vadd.f32 0.0, %v416
    %v418 = vpop.f32.mrb[0].mxu0
    %v419 = vadd.f32 0.0, %v418
    %v420 = vpop.f32.mrb[0].mxu0
    %v421 = vadd.f32 0.0, %v420
    %v422 = vpop.f32.mrb[0].mxu0
    %v423 = vadd.f32 0.0, %v422
    %424 = vdwg.mxu0
    %v427 = vunpack.c.l.b16 %v70
    %v428 = vunpack.c.l.b16 %v71
    %v429 = vpack.c.b16 %v428, %v427
    %v463 = vunpack.c.l.b16 %v76
    %v464 = vunpack.c.h.b16 %v76
    %v465 = vunpack.c.l.b16 %v77
    %v466 = vunpack.c.h.b16 %v77
    %v467 = vunpack.c.l.b16 %v78
    %v468 = vunpack.c.h.b16 %v78
    %v469 = vunpack.c.l.b16 %v79
    %v470 = vunpack.c.h.b16 %v79
    %v471 = vunpack.c.l.b16 %v80
    %v472 = vunpack.c.h.b16 %v80
    %v473 = vunpack.c.l.b16 %v81
    %v474 = vunpack.c.h.b16 %v81
    %v475 = vunpack.c.l.b16 %v82
    %v476 = vunpack.c.h.b16 %v82
    %v477 = vunpack.c.l.b16 %v83
    %v478 = vunpack.c.h.b16 %v83
    %v479 = vunpack.c.l.b16 %v84
    %v480 = vunpack.c.h.b16 %v84
    %v481 = vunpack.c.l.b16 %v85
    %v482 = vunpack.c.h.b16 %v85
    %v483 = vunpack.c.l.b16 %v86
    %v484 = vunpack.c.h.b16 %v86
    %v485 = vunpack.c.l.b16 %v87
    %v486 = vunpack.c.h.b16 %v87
    %v487 = vunpack.c.l.b16 %v88
    %v488 = vunpack.c.h.b16 %v88
    %v489 = vunpack.c.l.b16 %v89
    %v490 = vunpack.c.h.b16 %v89
    %v491 = vunpack.c.l.b16 %v90
    %v492 = vunpack.c.h.b16 %v90
    %v493 = vunpack.c.l.b16 %v91
    %v494 = vunpack.c.h.b16 %v91
    %v495 = vunpack.c.l.b16 %v92
    %v496 = vunpack.c.h.b16 %v92
    %v497 = vunpack.c.l.b16 %v93
    %v498 = vunpack.c.h.b16 %v93
    %v499 = vunpack.c.l.b16 %v94
    %v500 = vunpack.c.h.b16 %v94
    %v501 = vunpack.c.l.b16 %v95
    %v502 = vunpack.c.h.b16 %v95
    %v503 = vunpack.c.l.b16 %v96
    %v504 = vunpack.c.h.b16 %v96
    %v505 = vunpack.c.l.b16 %v97
    %v506 = vunpack.c.h.b16 %v97
    %v507 = vunpack.c.l.b16 %v98
    %v508 = vunpack.c.h.b16 %v98
    %v509 = vunpack.c.l.b16 %v99
    %v510 = vunpack.c.h.b16 %v99
    %v511 = vunpack.c.l.b16 %v100
    %v512 = vunpack.c.h.b16 %v100
    %v513 = vunpack.c.l.b16 %v101
    %v514 = vunpack.c.h.b16 %v101
    %v515 = vunpack.c.l.b16 %v102
    %v516 = vunpack.c.h.b16 %v102
    %v517 = vunpack.c.l.b16 %v103
    %v518 = vunpack.c.h.b16 %v103
    %v519 = vunpack.c.l.b16 %v104
    %v520 = vunpack.c.h.b16 %v104
    %v521 = vunpack.c.l.b16 %v105
    %v522 = vunpack.c.h.b16 %v105
    %v523 = vunpack.c.l.b16 %v106
    %v524 = vunpack.c.h.b16 %v106
    %v525 = vunpack.c.l.b16 %v107
    %v526 = vunpack.c.h.b16 %v107
    %v527 = vpack.c.b16 %v467, %v463
    %v528 = vpack.c.b16 %v468, %v464
    %v529 = vpack.c.b16 %v469, %v465
    %v530 = vpack.c.b16 %v470, %v466
    %v531 = vpack.c.b16 %v475, %v471
    %v532 = vpack.c.b16 %v476, %v472
    %v533 = vpack.c.b16 %v477, %v473
    %v534 = vpack.c.b16 %v478, %v474
    %v535 = vpack.c.b16 %v483, %v479
    %v536 = vpack.c.b16 %v484, %v480
    %v537 = vpack.c.b16 %v485, %v481
    %v538 = vpack.c.b16 %v486, %v482
    %v539 = vpack.c.b16 %v491, %v487
    %v540 = vpack.c.b16 %v492, %v488
    %v541 = vpack.c.b16 %v493, %v489
    %v542 = vpack.c.b16 %v494, %v490
    %v543 = vpack.c.b16 %v499, %v495
    %v544 = vpack.c.b16 %v500, %v496
    %v545 = vpack.c.b16 %v501, %v497
    %v546 = vpack.c.b16 %v502, %v498
    %v547 = vpack.c.b16 %v507, %v503
    %v548 = vpack.c.b16 %v508, %v504
    %v549 = vpack.c.b16 %v509, %v505
    %v550 = vpack.c.b16 %v510, %v506
    %v551 = vpack.c.b16 %v515, %v511
    %v552 = vpack.c.b16 %v516, %v512
    %v553 = vpack.c.b16 %v517, %v513
    %v554 = vpack.c.b16 %v518, %v514
    %v555 = vpack.c.b16 %v523, %v519
    %v556 = vpack.c.b16 %v524, %v520
    %v557 = vpack.c.b16 %v525, %v521
    %v558 = vpack.c.b16 %v526, %v522
    %591 = vmatprep.subr.bf16.mxu0 %v528
    %592 = vmatpush1.bf16.msra.mxu0 %v527
    %593 = vmatprep.subr.bf16.mxu0 %v532
    %594 = vmatpush1.bf16.msra.mxu0 %v531
    %595 = vmatprep.subr.bf16.mxu0 %v536
    %596 = vmatpush1.bf16.msra.mxu0 %v535
    %597 = vmatprep.subr.bf16.mxu0 %v540
    %598 = vmatpush1.bf16.msra.mxu0 %v539
    %599 = vmatprep.subr.bf16.mxu0 %v544
    %600 = vmatpush1.bf16.msra.mxu0 %v543
    %601 = vmatprep.subr.bf16.mxu0 %v548
    %602 = vmatpush1.bf16.msra.mxu0 %v547
    %603 = vmatprep.subr.bf16.mxu0 %v552
    %604 = vmatpush1.bf16.msra.mxu0 %v551
    %605 = vmatprep.subr.bf16.mxu0 %v556
    %606 = vmatpush1.bf16.msra.mxu0 %v555
    %607 = vmatprep.subr.bf16.mxu0 0
    %608 = vmatpush1.bf16.msra.mxu0 0
    %609 = vmatprep.subr.bf16.mxu0 0
    %610 = vmatpush1.bf16.msra.mxu0 0
    %611 = vmatprep.subr.bf16.mxu0 0
    %612 = vmatpush1.bf16.msra.mxu0 0
    %613 = vmatprep.subr.bf16.mxu0 0
    %614 = vmatpush1.bf16.msra.mxu0 0
    %615 = vmatprep.subr.bf16.mxu0 0
    %616 = vmatpush1.bf16.msra.mxu0 0
    %617 = vmatprep.subr.bf16.mxu0 0
    %618 = vmatpush1.bf16.msra.mxu0 0
    %619 = vmatprep.subr.bf16.mxu0 0
    %620 = vmatpush1.bf16.msra.mxu0 0
    %621 = vmatprep.subr.bf16.mxu0 0
    %622 = vmatpush1.bf16.msra.mxu0 0
    %623 = vmatprep.mubr.bf16.mxu0 0
    %624 = vmatmul.mubr.bf16.gmra.mrb[0].mxu0 %v429
    %v625 = vpop.f32.mrb[0].mxu0
    %v626 = vadd.f32 %v374, %v625
    %v627 = vpop.f32.mrb[0].mxu0
    %v628 = vadd.f32 %v376, %v627
    %v629 = vpop.f32.mrb[0].mxu0
    %v630 = vadd.f32 %v378, %v629
    %v631 = vpop.f32.mrb[0].mxu0
    %v632 = vadd.f32 %v380, %v631
    %633 = vdwg.mxu0
    %634 = vmatprep.subr.bf16.mxu0 %v530
    %635 = vmatpush1.bf16.msra.mxu0 %v529
    %636 = vmatprep.subr.bf16.mxu0 %v534
    %637 = vmatpush1.bf16.msra.mxu0 %v533
    %638 = vmatprep.subr.bf16.mxu0 %v538
    %639 = vmatpush1.bf16.msra.mxu0 %v537
    %640 = vmatprep.subr.bf16.mxu0 %v542
    %641 = vmatpush1.bf16.msra.mxu0 %v541
    %642 = vmatprep.subr.bf16.mxu0 %v546
    %643 = vmatpush1.bf16.msra.mxu0 %v545
    %644 = vmatprep.subr.bf16.mxu0 %v550
    %645 = vmatpush1.bf16.msra.mxu0 %v549
    %646 = vmatprep.subr.bf16.mxu0 %v554
    %647 = vmatpush1.bf16.msra.mxu0 %v553
    %648 = vmatprep.subr.bf16.mxu0 %v558
    %649 = vmatpush1.bf16.msra.mxu0 %v557
    %650 = vmatprep.subr.bf16.mxu0 0
    %651 = vmatpush1.bf16.msra.mxu0 0
    %652 = vmatprep.subr.bf16.mxu0 0
    %653 = vmatpush1.bf16.msra.mxu0 0
    %654 = vmatprep.subr.bf16.mxu0 0
    %655 = vmatpush1.bf16.msra.mxu0 0
    %656 = vmatprep.subr.bf16.mxu0 0
    %657 = vmatpush1.bf16.msra.mxu0 0
    %658 = vmatprep.subr.bf16.mxu0 0
    %659 = vmatpush1.bf16.msra.mxu0 0
    %660 = vmatprep.subr.bf16.mxu0 0
    %661 = vmatpush1.bf16.msra.mxu0 0
    %662 = vmatprep.subr.bf16.mxu0 0
    %663 = vmatpush1.bf16.msra.mxu0 0
    %664 = vmatprep.subr.bf16.mxu0 0
    %665 = vmatpush1.bf16.msra.mxu0 0
    %666 = vmatprep.mubr.bf16.mxu0 0
    %667 = vmatmul.mubr.bf16.gmra.mrb[0].mxu0 %v429
    %v668 = vpop.f32.mrb[0].mxu0
    %v669 = vadd.f32 %v417, %v668
    %v670 = vpop.f32.mrb[0].mxu0
    %v671 = vadd.f32 %v419, %v670
    %v672 = vpop.f32.mrb[0].mxu0
    %v673 = vadd.f32 %v421, %v672
    %v674 = vpop.f32.mrb[0].mxu0
    %v675 = vadd.f32 %v423, %v674
    %676 = vdwg.mxu0
    %v678 = vlaneseq
    %v679 = vshrl.u32 %v678, 7
    %v680 = vsub.s32 0, %v679
    %v681 = vrot.slane %v172, %v680
    %v682 = vlaneseq
    %v683 = vshrl.u32 %v682, 7
    %v684 = vsub.s32 1, %v683
    %v685 = vrot.slane %v172, %v684
    %v686 = vlaneseq
    %v687 = vshrl.u32 %v686, 7
    %v688 = vsub.s32 2, %v687
    %v689 = vrot.slane %v172, %v688
    %v690 = vlaneseq
    %v691 = vshrl.u32 %v690, 7
    %v692 = vsub.s32 3, %v691
    %v693 = vrot.slane %v172, %v692
    %v698 = vadd.f32 %v626, %v681
    %v699 = vadd.f32 %v628, %v685
    %v700 = vadd.f32 %v669, %v689
    %v701 = vadd.f32 %v671, %v693
    %v702 = vadd.f32 %v630, %v681
    %v703 = vadd.f32 %v632, %v685
    %v704 = vadd.f32 %v673, %v689
    %v705 = vadd.f32 %v675, %v693
    %v706 = vpack.c.bf16 %v75, %v74
    %v739 = vunpack.c.l.b16 %v140
    %v740 = vunpack.c.h.b16 %v140
    %v741 = vunpack.c.l.b16 %v141
    %v742 = vunpack.c.l.b16 %v142
    %v743 = vunpack.c.h.b16 %v142
    %v744 = vunpack.c.l.b16 %v143
    %v745 = vunpack.c.l.b16 %v144
    %v746 = vunpack.c.h.b16 %v144
    %v747 = vunpack.c.l.b16 %v145
    %v748 = vunpack.c.l.b16 %v146
    %v749 = vunpack.c.h.b16 %v146
    %v750 = vunpack.c.l.b16 %v147
    %v751 = vunpack.c.l.b16 %v148
    %v752 = vunpack.c.h.b16 %v148
    %v753 = vunpack.c.l.b16 %v149
    %v754 = vunpack.c.l.b16 %v150
    %v755 = vunpack.c.h.b16 %v150
    %v756 = vunpack.c.l.b16 %v151
    %v757 = vunpack.c.l.b16 %v152
    %v758 = vunpack.c.h.b16 %v152
    %v759 = vunpack.c.l.b16 %v153
    %v760 = vunpack.c.l.b16 %v154
    %v761 = vunpack.c.h.b16 %v154
    %v762 = vunpack.c.l.b16 %v155
    %v763 = vunpack.c.l.b16 %v156
    %v764 = vunpack.c.h.b16 %v156
    %v765 = vunpack.c.l.b16 %v157
    %v766 = vunpack.c.l.b16 %v158
    %v767 = vunpack.c.h.b16 %v158
    %v768 = vunpack.c.l.b16 %v159
    %v769 = vunpack.c.l.b16 %v160
    %v770 = vunpack.c.h.b16 %v160
    %v771 = vunpack.c.l.b16 %v161
    %v772 = vunpack.c.l.b16 %v162
    %v773 = vunpack.c.h.b16 %v162
    %v774 = vunpack.c.l.b16 %v163
    %v775 = vunpack.c.l.b16 %v164
    %v776 = vunpack.c.h.b16 %v164
    %v777 = vunpack.c.l.b16 %v165
    %v778 = vunpack.c.l.b16 %v166
    %v779 = vunpack.c.h.b16 %v166
    %v780 = vunpack.c.l.b16 %v167
    %v781 = vunpack.c.l.b16 %v168
    %v782 = vunpack.c.h.b16 %v168
    %v783 = vunpack.c.l.b16 %v169
    %v784 = vunpack.c.l.b16 %v170
    %v785 = vunpack.c.h.b16 %v170
    %v786 = vunpack.c.l.b16 %v171
    %v787 = vpack.c.b16 %v742, %v739
    %v788 = vpack.c.b16 %v743, %v740
    %v789 = vpack.c.b16 %v744, %v741
    %v790 = vpack.c.b16 %v748, %v745
    %v791 = vpack.c.b16 %v749, %v746
    %v792 = vpack.c.b16 %v750, %v747
    %v793 = vpack.c.b16 %v754, %v751
    %v794 = vpack.c.b16 %v755, %v752
    %v795 = vpack.c.b16 %v756, %v753
    %v796 = vpack.c.b16 %v760, %v757
    %v797 = vpack.c.b16 %v761, %v758
    %v798 = vpack.c.b16 %v762, %v759
    %v799 = vpack.c.b16 %v766, %v763
    %v800 = vpack.c.b16 %v767, %v764
    %v801 = vpack.c.b16 %v768, %v765
    %v802 = vpack.c.b16 %v772, %v769
    %v803 = vpack.c.b16 %v773, %v770
    %v804 = vpack.c.b16 %v774, %v771
    %v805 = vpack.c.b16 %v778, %v775
    %v806 = vpack.c.b16 %v779, %v776
    %v807 = vpack.c.b16 %v780, %v777
    %v808 = vpack.c.b16 %v784, %v781
    %v809 = vpack.c.b16 %v785, %v782
    %v810 = vpack.c.b16 %v786, %v783
    %835 = vmatprep.subr.bf16.mxu0 %v788
    %836 = vmatpush1.bf16.msra.mxu0 %v787
    %837 = vmatprep.subr.bf16.mxu0 %v791
    %838 = vmatpush1.bf16.msra.mxu0 %v790
    %839 = vmatprep.subr.bf16.mxu0 %v794
    %840 = vmatpush1.bf16.msra.mxu0 %v793
    %841 = vmatprep.subr.bf16.mxu0 %v797
    %842 = vmatpush1.bf16.msra.mxu0 %v796
    %843 = vmatprep.subr.bf16.mxu0 %v800
    %844 = vmatpush1.bf16.msra.mxu0 %v799
    %845 = vmatprep.subr.bf16.mxu0 %v803
    %846 = vmatpush1.bf16.msra.mxu0 %v802
    %847 = vmatprep.subr.bf16.mxu0 %v806
    %848 = vmatpush1.bf16.msra.mxu0 %v805
    %849 = vmatprep.subr.bf16.mxu0 %v809
    %850 = vmatpush1.bf16.msra.mxu0 %v808
    %851 = vmatprep.subr.bf16.mxu0 0
    %852 = vmatpush1.bf16.msra.mxu0 0
    %853 = vmatprep.subr.bf16.mxu0 0
    %854 = vmatpush1.bf16.msra.mxu0 0
    %855 = vmatprep.subr.bf16.mxu0 0
    %856 = vmatpush1.bf16.msra.mxu0 0
    %857 = vmatprep.subr.bf16.mxu0 0
    %858 = vmatpush1.bf16.msra.mxu0 0
    %859 = vmatprep.subr.bf16.mxu0 0
    %860 = vmatpush1.bf16.msra.mxu0 0
    %861 = vmatprep.subr.bf16.mxu0 0
    %862 = vmatpush1.bf16.msra.mxu0 0
    %863 = vmatprep.subr.bf16.mxu0 0
    %864 = vmatpush1.bf16.msra.mxu0 0
    %865 = vmatprep.subr.bf16.mxu0 0
    %866 = vmatpush1.bf16.msra.mxu0 0
    %867 = vmatprep.mubr.bf16.mxu0 0
    %868 = vmatmul.mubr.bf16.gmra.mrb[0].mxu0 %v706
    %v869 = vpop.f32.mrb[0].mxu0
    %v870 = vadd.f32 0.0, %v869
    %v871 = vpop.f32.mrb[0].mxu0
    %v872 = vadd.f32 0.0, %v871
    %v873 = vpop.f32.mrb[0].mxu0
    %v874 = vadd.f32 0.0, %v873
    %v875 = vpop.f32.mrb[0].mxu0
    %v876 = vadd.f32 0.0, %v875
    %877 = vdwg.mxu0
    %878 = vmatprep.subr.bf16.mxu0 0
    %879 = vmatpush1.bf16.msra.mxu0 %v789
    %880 = vmatprep.subr.bf16.mxu0 0
    %881 = vmatpush1.bf16.msra.mxu0 %v792
    %882 = vmatprep.subr.bf16.mxu0 0
    %883 = vmatpush1.bf16.msra.mxu0 %v795
    %884 = vmatprep.subr.bf16.mxu0 0
    %885 = vmatpush1.bf16.msra.mxu0 %v798
    %886 = vmatprep.subr.bf16.mxu0 0
    %887 = vmatpush1.bf16.msra.mxu0 %v801
    %888 = vmatprep.subr.bf16.mxu0 0
    %889 = vmatpush1.bf16.msra.mxu0 %v804
    %890 = vmatprep.subr.bf16.mxu0 0
    %891 = vmatpush1.bf16.msra.mxu0 %v807
    %892 = vmatprep.subr.bf16.mxu0 0
    %893 = vmatpush1.bf16.msra.mxu0 %v810
    %894 = vmatprep.subr.bf16.mxu0 0
    %895 = vmatpush1.bf16.msra.mxu0 0
    %896 = vmatprep.subr.bf16.mxu0 0
    %897 = vmatpush1.bf16.msra.mxu0 0
    %898 = vmatprep.subr.bf16.mxu0 0
    %899 = vmatpush1.bf16.msra.mxu0 0
    %900 = vmatprep.subr.bf16.mxu0 0
    %901 = vmatpush1.bf16.msra.mxu0 0
    %902 = vmatprep.subr.bf16.mxu0 0
    %903 = vmatpush1.bf16.msra.mxu0 0
    %904 = vmatprep.subr.bf16.mxu0 0
    %905 = vmatpush1.bf16.msra.mxu0 0
    %906 = vmatprep.subr.bf16.mxu0 0
    %907 = vmatpush1.bf16.msra.mxu0 0
    %908 = vmatprep.subr.bf16.mxu0 0
    %909 = vmatpush1.bf16.msra.mxu0 0
    %910 = vmatprep.mubr.bf16.mxu0 0
    %911 = vmatmul.mubr.bf16.gmra.mrb[0].mxu0 %v706
    %v912 = vpop.f32.mrb[0].mxu0
    %v913 = vadd.f32 0.0, %v912
    %v914 = vpop.f32.mrb[0].mxu0
    %v915 = vpop.f32.mrb[0].mxu0
    %v916 = vadd.f32 0.0, %v915
    %v917 = vpop.f32.mrb[0].mxu0
    %918 = vdwg.mxu0
    %v919 = vadd.f32 %v698, %v870
    %v920 = vadd.f32 %v699, %v872
    %v921 = vadd.f32 %v700, %v913
    %v922 = vadd.f32 %v702, %v874
    %v923 = vadd.f32 %v703, %v876
    %v924 = vadd.f32 %v704, %v916
    %v925 = vmul.f32 %v919, 0.5
    %v926 = vmul.f32 %v920, 0.5
    %v927 = vmul.f32 %v921, 0.5
    %v928 = vmul.f32 %v922, 0.5
    %v929 = vmul.f32 %v923, 0.5
    %v930 = vmul.f32 %v924, 0.5
    %v931 = vtanh.pop %v925
    %v932 = vtanh.pop %v926
    %v933 = vtanh.pop %v927
    %v934 = vtanh.pop %v928
    %v935 = vtanh.pop %v929
    %v936 = vtanh.pop %v930
    %v937 = vmul.f32 %v931, 0.5
    %v938 = vmul.f32 %v932, 0.5
    %v939 = vmul.f32 %v933, 0.5
    %v940 = vmul.f32 %v934, 0.5
    %v941 = vmul.f32 %v935, 0.5
    %v942 = vmul.f32 %v936, 0.5
    %v943 = vadd.f32 %v937, 0.5
    %v944 = vadd.f32 %v938, 0.5
    %v945 = vadd.f32 %v939, 0.5
    %v946 = vadd.f32 %v940, 0.5
    %v947 = vadd.f32 %v941, 0.5
    %v948 = vadd.f32 %v942, 0.5
    %v949 = vtanh.pop %v701
    %v950 = vtanh.pop %v705
    %v951 = vmul.f32 %v949, %v943
    %v952 = vmul.f32 %v950, %v946
    %v953 = vmul.f32 %v944, %v74
    %v954 = vmul.f32 %v947, %v75
    %v955 = vadd.f32 %v951, %v953
    %v956 = vadd.f32 %v952, %v954
    %v957 = vtanh.pop %v955
    %v958 = vtanh.pop %v956
    %v959 = vmul.f32 %v945, %v957
    %v960 = vmul.f32 %v948, %v958
    %v961 = vpack.c.bf16 %v960, %v959
    %v963 = vunpack.c.l.b16 %v961
    %v964 = vunpack.c.h.b16 %v961
    %v965 = vpack.c.b16 %v963, %v963
    %v966 = vpack.c.b16 %v964, %v964
    %969 = vst [vmem:[%s7] sm:$0xf] %v965
    %970 = vst [vmem:[%s7 + $0x4] sm:$0xf] %v966
    %971 = vst [vmem:[%s8] sm:$0xff] %v955
    %972 = vst [vmem:[%s8 + $0x8] sm:$0xff] %v956
    // Predicated region
    $region42: #{lstm_cell_forward.1} parent=1 // pred_check
      _
    $region43: #{lstm_cell_forward.1} parent=1 // pred_check_branch
      %974 = sbr.rel (0) target = $region45
    $region44: #{lstm_cell_forward.1} parent=1 // pred_region
      _
    $region45: #{lstm_cell_forward.1} parent=1 // pred_fallthru
      _
    // Predicated region
    $region46: #{lstm_cell_forward.1} parent=1 // pred_check
      _
    $region47: #{lstm_cell_forward.1} parent=1 // pred_check_branch
      %976 = sbr.rel (0) target = $region49
    $region48: #{lstm_cell_forward.1} parent=1 // pred_region
      _
    $region49: #{lstm_cell_forward.1} parent=1 // pred_fallthru
      _
    // Predicated region
    $region50: #{lstm_cell_forward.1} parent=1 // pred_check
      _
    $region51: #{lstm_cell_forward.1} parent=1 // pred_check_branch
      %978 = sbr.rel (0) target = $region53
    $region52: #{lstm_cell_forward.1} parent=1 // pred_region
      _
    $region53: #{lstm_cell_forward.1} parent=1 // pred_fallthru
      _
    // Predicated region
    $region54: #{lstm_cell_forward.1} parent=1 // pred_check
      _
    $region55: #{lstm_cell_forward.1} parent=1 // pred_check_branch
      %980 = sbr.rel (0) target = $region57
    $region56: #{lstm_cell_forward.1} parent=1 // pred_region
      _
    $region57: #{lstm_cell_forward.1} parent=1 // pred_fallthru
      _
    %981 = vsyncpa [#allocation3], 1
    %982 = vsyncpa [#allocation5], 1

</llo_original>
